<compile_context>
chip_gen: v6e
topology: v6e:2x2x1
jax: 0.10.0
libtpu: 0.0.40
codegen_flags: <defaults>
</compile_context>

<pallas_src>
import functools

import jax
import jax.numpy as jnp
from jax.experimental import pallas as pl
from jax.experimental.pallas import tpu as pltpu


def _round_up(v: int, m: int) -> int:
    return ((v + m - 1) // m) * m


def taskdecoder_kernel(x_ref, w1_ref, b1_ref, w2_ref, b2_ref, o_ref):
    # fc1: x @ W1 + b1   (W1 stored pre-transposed as (in, hidden))
    x = x_ref[...].astype(jnp.float32)
    h = jnp.dot(x, w1_ref[...].astype(jnp.float32),
                preferred_element_type=jnp.float32) + b1_ref[...].astype(jnp.float32)
    # LeakyReLU, PyTorch default negative_slope = 0.01 (f32 on the VPU).
    h = jnp.where(h > 0, h, jnp.float32(0.01) * h)
    # fc2: h @ W2 + b2   (W2 stored pre-transposed as (hidden, out))
    out = jnp.dot(h, w2_ref[...].astype(jnp.float32),
                  preferred_element_type=jnp.float32) + b2_ref[...].astype(jnp.float32)
    o_ref[...] = out.astype(o_ref.dtype)


@functools.partial(jax.jit, static_argnames=("tm",))
def task_decoder_forward(x, w1_t, b1, w2_t, b2, *, tm: int = 512):
    """x: (N, input_dim); w1_t: (input_dim, hidden); b1: (1, hidden);
    w2_t: (hidden, output_dim); b2: (1, output_dim)."""
    n, in_dim = x.shape
    in_dim_w, hid = w1_t.shape
    hid_w, out_dim = w2_t.shape
    assert in_dim_w == in_dim and hid_w == hid

    # Lane-dense padding of feature dims (multiples of 128); zero-padded weights/biases
    # leave the math unchanged and are padded once on the host side of the kernel.
    in_p = _round_up(in_dim, 128)
    hid_p = _round_up(hid, 128)
    out_p = _round_up(out_dim, 128)

    # Batch tile: as large as useful, but a multiple of 8 (sublane) and <= padded batch.
    tile_m = min(tm, _round_up(n, 8))
    tile_m = _round_up(tile_m, 8)
    n_p = _round_up(max(n, tile_m), tile_m)

    x_p = jnp.pad(x, ((0, n_p - n), (0, in_p - in_dim)))
    w1_p = jnp.pad(w1_t, ((0, in_p - in_dim), (0, hid_p - hid)))
    b1_p = jnp.pad(b1, ((0, 0), (0, hid_p - hid)))
    w2_p = jnp.pad(w2_t, ((0, hid_p - hid), (0, out_p - out_dim)))
    b2_p = jnp.pad(b2, ((0, 0), (0, out_p - out_dim)))

    grid = (n_p // tile_m,)

    itemsize = jnp.dtype(x.dtype).itemsize
    cost = pl.CostEstimate(
        flops=2 * n * (in_dim * hid + hid * out_dim),
        transcendentals=0,
        bytes_accessed=(n * (in_dim + out_dim) + in_dim * hid + hid * out_dim
                        + hid + out_dim) * itemsize,
    )

    out_padded = pl.pallas_call(
        taskdecoder_kernel,
        out_shape=jax.ShapeDtypeStruct((n_p, out_p), x.dtype),
        grid_spec=pl.GridSpec(
            grid=grid,
            in_specs=[
                pl.BlockSpec((tile_m, in_p), lambda i: (i, 0)),   # x tile (pipelined)
                pl.BlockSpec((in_p, hid_p), lambda i: (0, 0)),    # W1 (resident)
                pl.BlockSpec((1, hid_p), lambda i: (0, 0)),       # b1 (resident)
                pl.BlockSpec((hid_p, out_p), lambda i: (0, 0)),   # W2 (resident)
                pl.BlockSpec((1, out_p), lambda i: (0, 0)),       # b2 (resident)
            ],
            out_specs=pl.BlockSpec((tile_m, out_p), lambda i: (i, 0)),
        ),
        compiler_params=pltpu.CompilerParams(
            dimension_semantics=("parallel",),
        ),
        cost_estimate=cost,
    )(x_p, w1_p, b1_p, w2_p, b2_p)

    return out_padded[:n, :out_dim]


def init_linear_params(key, in_features, out_features):
    # Mimics nn.Linear default init: U(-1/sqrt(fan_in), 1/sqrt(fan_in)).
    kw, kb = jax.random.split(key)
    bound = 1.0 / jnp.sqrt(jnp.float32(in_features))
    # Weight stored pre-transposed: (in_features, out_features).
    w_t = jax.random.uniform(kw, (in_features, out_features), jnp.float32,
                             minval=-bound, maxval=bound)
    b = jax.random.uniform(kb, (1, out_features), jnp.float32,
                           minval=-bound, maxval=bound)
    return w_t, b


if __name__ == "__main__":
    input_dim, hidden_dim, output_dim = 32, 64, 16
    batch = 8

    root = jax.random.PRNGKey(0)
    k_x, k_fc1, k_fc2 = jax.random.split(root, 3)

    x = jax.random.normal(k_x, (batch, input_dim), jnp.float32)
    w1_t, b1 = init_linear_params(k_fc1, input_dim, hidden_dim)
    w2_t, b2 = init_linear_params(k_fc2, hidden_dim, output_dim)

    out = task_decoder_forward(x, w1_t, b1, w2_t, b2)
    out = jax.block_until_ready(out)

    # Pure-JAX reference of the same forward pass.
    h_ref = x @ w1_t + b1
    h_ref = jnp.where(h_ref > 0, h_ref, 0.01 * h_ref)
    ref = h_ref @ w2_t + b2
    assert out.shape == (batch, output_dim)
    assert jnp.allclose(out, ref, atol=1e-5, rtol=1e-5)

    print("KERNEL_OK")
</pallas_src>

<mosaic_0001>
module attributes {stable_mosaic.version = 11 : i64} {
  func.func @taskdecoder_kernel(%arg0: i32, %arg1: memref<8x128xf32, #tpu.memory_space<vmem>>, %arg2: memref<128x128xf32, #tpu.memory_space<vmem>>, %arg3: memref<1x128xf32, #tpu.memory_space<vmem>>, %arg4: memref<128x128xf32, #tpu.memory_space<vmem>>, %arg5: memref<1x128xf32, #tpu.memory_space<vmem>>, %arg6: memref<8x128xf32, #tpu.memory_space<vmem>>) attributes {dimension_semantics = [#tpu.dimension_semantics<parallel>], iteration_bounds = array<i64: 1>, scalar_prefetch = 0 : i64, scratch_operands = 0 : i64, tpu.core_type = #tpu.core_type<tc>, window_params = [{transform_indices = @transform_0, window_bounds = array<i64: 8, 128>}, {pipeline_mode = #tpu.pipeline_mode<synchronous>, transform_indices = @transform_1, window_bounds = array<i64: 128, 128>}, {pipeline_mode = #tpu.pipeline_mode<synchronous>, transform_indices = @transform_2, window_bounds = array<i64: 1, 128>}, {pipeline_mode = #tpu.pipeline_mode<synchronous>, transform_indices = @transform_3, window_bounds = array<i64: 128, 128>}, {pipeline_mode = #tpu.pipeline_mode<synchronous>, transform_indices = @transform_4, window_bounds = array<i64: 1, 128>}, {transform_indices = @transform_5, window_bounds = array<i64: 8, 128>}]} {
    %c0 = arith.constant 0 : index
    %c0_0 = arith.constant 0 : index
    %0 = vector.load %arg1[%c0, %c0_0] : memref<8x128xf32, #tpu.memory_space<vmem>>, vector<8x128xf32>
    %c0_1 = arith.constant 0 : index
    %c0_2 = arith.constant 0 : index
    %1 = vector.load %arg2[%c0_1, %c0_2] : memref<128x128xf32, #tpu.memory_space<vmem>>, vector<128x128xf32>
    %cst = arith.constant dense<0.000000e+00> : vector<8x128xf32>
    %2 = tpu.matmul %0, %1, %cst {dimension_numbers = #tpu.dot_dimension_numbers<[1], [0], [0], [1], [0, 0, 1, 1], [], []>} : vector<8x128xf32>, vector<128x128xf32>, vector<8x128xf32> -> vector<8x128xf32>
    %c0_3 = arith.constant 0 : index
    %c0_4 = arith.constant 0 : index
    %3 = vector.load %arg3[%c0_3, %c0_4] : memref<1x128xf32, #tpu.memory_space<vmem>>, vector<1x128xf32>
    %4 = vector.broadcast %3 : vector<1x128xf32> to vector<8x128xf32>
    %5 = arith.addf %2, %4 : vector<8x128xf32>
    %cst_5 = arith.constant 0.000000e+00 : f32
    %6 = vector.broadcast %cst_5 : f32 to vector<8x128xf32>
    %7 = arith.cmpf ogt, %5, %6 : vector<8x128xf32>
    %cst_6 = arith.constant 0.00999999977 : f32
    %8 = vector.broadcast %cst_6 : f32 to vector<8x128xf32>
    %9 = arith.mulf %8, %5 : vector<8x128xf32>
    %10 = arith.select %7, %5, %9 : vector<8x128xi1>, vector<8x128xf32>
    %c0_7 = arith.constant 0 : index
    %c0_8 = arith.constant 0 : index
    %11 = vector.load %arg4[%c0_7, %c0_8] : memref<128x128xf32, #tpu.memory_space<vmem>>, vector<128x128xf32>
    %cst_9 = arith.constant dense<0.000000e+00> : vector<8x128xf32>
    %12 = tpu.matmul %10, %11, %cst_9 {dimension_numbers = #tpu.dot_dimension_numbers<[1], [0], [0], [1], [0, 0, 1, 1], [], []>} : vector<8x128xf32>, vector<128x128xf32>, vector<8x128xf32> -> vector<8x128xf32>
    %c0_10 = arith.constant 0 : index
    %c0_11 = arith.constant 0 : index
    %13 = vector.load %arg5[%c0_10, %c0_11] : memref<1x128xf32, #tpu.memory_space<vmem>>, vector<1x128xf32>
    %14 = vector.broadcast %13 : vector<1x128xf32> to vector<8x128xf32>
    %15 = arith.addf %12, %14 : vector<8x128xf32>
    %c0_12 = arith.constant 0 : index
    %c0_13 = arith.constant 0 : index
    %16 = vector.load %arg6[%c0_12, %c0_13] : memref<8x128xf32, #tpu.memory_space<vmem>>, vector<8x128xf32>
    tpu.vector_store %arg6[%c0_12, %c0_13], %15 {strides = array<i32>} : memref<8x128xf32, #tpu.memory_space<vmem>>, vector<8x128xf32>,
    return
  }
  func.func @transform_0(%arg0: i32) -> (i32, i32) {
    %c0_i32 = arith.constant 0 : i32
    %c0_i32_0 = arith.constant 0 : i32
    return %arg0, %c0_i32 : i32, i32
  }
  func.func @transform_1(%arg0: i32) -> (i32, i32) {
    %c0_i32 = arith.constant 0 : i32
    %c0_i32_0 = arith.constant 0 : i32
    %c0_i32_1 = arith.constant 0 : i32
    return %c0_i32, %c0_i32_0 : i32, i32
  }
  func.func @transform_2(%arg0: i32) -> (i32, i32) {
    %c0_i32 = arith.constant 0 : i32
    %c0_i32_0 = arith.constant 0 : i32
    %c0_i32_1 = arith.constant 0 : i32
    return %c0_i32, %c0_i32_0 : i32, i32
  }
  func.func @transform_3(%arg0: i32) -> (i32, i32) {
    %c0_i32 = arith.constant 0 : i32
    %c0_i32_0 = arith.constant 0 : i32
    %c0_i32_1 = arith.constant 0 : i32
    return %c0_i32, %c0_i32_0 : i32, i32
  }
  func.func @transform_4(%arg0: i32) -> (i32, i32) {
    %c0_i32 = arith.constant 0 : i32
    %c0_i32_0 = arith.constant 0 : i32
    %c0_i32_1 = arith.constant 0 : i32
    return %c0_i32, %c0_i32_0 : i32, i32
  }
  func.func @transform_5(%arg0: i32) -> (i32, i32) {
    %c0_i32 = arith.constant 0 : i32
    %c0_i32_0 = arith.constant 0 : i32
    return %arg0, %c0_i32 : i32, i32
  }
}

</mosaic_0001>

<llo_original>
// kernel: task_decoder_forward.1
$region0: #{task_decoder_forward.1}
  #allocation0 [shape = 'u32[]', space=smem, size = 0x4, offset = 0x4, fixed_abs, tag = 'smem constant byte address 0x4 - core index']
  #allocation1 [shape = 'u32[144,128]{1,0:T(1,128)}', space=vmem, size = 0x12000, scoped, tag = 'internal scratch']
  %s0 = inlined_call_operand.vmem [shape: f32[8,128], index: 0, kind: input, shape index: {}]
  %s1 = inlined_call_operand.vmem [shape: f32[128,128], index: 1, kind: input, shape index: {}]
  %s2 = inlined_call_operand.vmem [shape: f32[1,128], index: 2, kind: input, shape index: {}]
  %s3 = inlined_call_operand.vmem [shape: f32[128,128], index: 3, kind: input, shape index: {}]
  %s4 = inlined_call_operand.vmem [shape: f32[1,128], index: 4, kind: input, shape index: {}]
  %s5 = inlined_call_operand.hbm [shape: f32[8,128], index: 5, kind: output, shape index: {}]
  %s6 = sld [smem:[#allocation0]]
  $region30: #{task_decoder_forward.1} parent=0
    _
  %s8 = ssub.s32 1, %s6
  %s9 = scalar_select 0, %s8, %s6
  $region1: #{task_decoder_forward.1} parent=0
    #allocation2 [shape = 'u8[4096]{0}', space=vmem, size = 0x1000, scoped, tag = 'output window, operand 0, single buffered']
    #allocation3 [shape = 's32[1]{0}', space=sflag, size = 0x4, scoped, tag = 'scoped memory for task_decoder_forward.1']
    %10 = vsyncpa [#allocation3], 0
    // Predicated region
    $region2: #{task_decoder_forward.1} parent=1 // pred_check
      _
    $region3: #{task_decoder_forward.1} parent=1 // pred_check_branch
      %12 = sbr.rel (0) target = $region5
    $region4: #{task_decoder_forward.1} parent=1 // pred_region
      _
    $region5: #{task_decoder_forward.1} parent=1 // pred_fallthru
      _
    // Predicated region
    $region6: #{task_decoder_forward.1} parent=1 // pred_check
      _
    $region7: #{task_decoder_forward.1} parent=1 // pred_check_branch
      %14 = sbr.rel (0) target = $region9
    $region8: #{task_decoder_forward.1} parent=1 // pred_region
      _
    $region9: #{task_decoder_forward.1} parent=1 // pred_fallthru
      _
    // Predicated region
    $region10: #{task_decoder_forward.1} parent=1 // pred_check
      _
    $region11: #{task_decoder_forward.1} parent=1 // pred_check_branch
      %16 = sbr.rel (0) target = $region13
    $region12: #{task_decoder_forward.1} parent=1 // pred_region
      _
    $region13: #{task_decoder_forward.1} parent=1 // pred_fallthru
      _
    // Predicated region
    $region14: #{task_decoder_forward.1} parent=1 // pred_check
      _
    $region15: #{task_decoder_forward.1} parent=1 // pred_check_branch
      %18 = sbr.rel (0) target = $region17
    $region16: #{task_decoder_forward.1} parent=1 // pred_region
      _
    $region17: #{task_decoder_forward.1} parent=1 // pred_fallthru
      _
    // Predicated region
    $region18: #{task_decoder_forward.1} parent=1 // pred_check
      _
    $region19: #{task_decoder_forward.1} parent=1 // pred_check_branch
      %20 = sbr.rel (0) target = $region21
    $region20: #{task_decoder_forward.1} parent=1 // pred_region
      _
    $region21: #{task_decoder_forward.1} parent=1 // pred_fallthru
      _
    %v21 = vld [vmem:[%s0] sm:$0xff]
    %v22 = vld [vmem:[%s1] sm:$0xff]
    %v23 = vld [vmem:[%s1 + $0x8] sm:$0xff]
    %v24 = vld [vmem:[%s1 + $0x10] sm:$0xff]
    %v25 = vld [vmem:[%s1 + $0x18] sm:$0xff]
    %v26 = vld [vmem:[%s1 + $0x20] sm:$0xff]
    %v27 = vld [vmem:[%s1 + $0x28] sm:$0xff]
    %v28 = vld [vmem:[%s1 + $0x30] sm:$0xff]
    %v29 = vld [vmem:[%s1 + $0x38] sm:$0xff]
    %v30 = vld [vmem:[%s1 + $0x40] sm:$0xff]
    %v31 = vld [vmem:[%s1 + $0x48] sm:$0xff]
    %v32 = vld [vmem:[%s1 + $0x50] sm:$0xff]
    %v33 = vld [vmem:[%s1 + $0x58] sm:$0xff]
    %v34 = vld [vmem:[%s1 + $0x60] sm:$0xff]
    %v35 = vld [vmem:[%s1 + $0x68] sm:$0xff]
    %v36 = vld [vmem:[%s1 + $0x70] sm:$0xff]
    %v37 = vld [vmem:[%s1 + $0x78] sm:$0xff]
    %v38 = vld [vmem:[%s2] sm:$0x1]
    %v40 = vlaneseq
    %v41 = vshrl.u32 %v40, 7
    %v42 = vsub.s32 0, %v41
    %v43 = vrot.slane %v38, %v42
    %45 = vmatprep.subr.mxu0 0.0
    %46 = vmatpush1.msra.mxu0 %v37
    %47 = vmatprep.subr.mxu0 0.0
    %48 = vmatpush1.msra.mxu0 %v36
    %49 = vmatprep.subr.mxu0 0.0
    %50 = vmatpush1.msra.mxu0 %v35
    %51 = vmatprep.subr.mxu0 0.0
    %52 = vmatpush1.msra.mxu0 %v34
    %53 = vmatprep.subr.mxu0 0.0
    %54 = vmatpush1.msra.mxu0 %v33
    %55 = vmatprep.subr.mxu0 0.0
    %56 = vmatpush1.msra.mxu0 %v32
    %57 = vmatprep.subr.mxu0 0.0
    %58 = vmatpush1.msra.mxu0 %v31
    %59 = vmatprep.subr.mxu0 0.0
    %60 = vmatpush1.msra.mxu0 %v30
    %61 = vmatprep.subr.mxu0 0.0
    %62 = vmatpush1.msra.mxu0 %v29
    %63 = vmatprep.subr.mxu0 0.0
    %64 = vmatpush1.msra.mxu0 %v28
    %65 = vmatprep.subr.mxu0 0.0
    %66 = vmatpush1.msra.mxu0 %v27
    %67 = vmatprep.subr.mxu0 0.0
    %68 = vmatpush1.msra.mxu0 %v26
    %69 = vmatprep.subr.mxu0 0.0
    %70 = vmatpush1.msra.mxu0 %v25
    %71 = vmatprep.subr.mxu0 0.0
    %72 = vmatpush1.msra.mxu0 %v24
    %73 = vmatprep.subr.mxu0 0.0
    %74 = vmatpush1.msra.mxu0 %v23
    %75 = vmatprep.subr.mxu0 0.0
    %76 = vmatpush1.msra.mxu0 %v22
    %77 = vmatprep.subr.mxu0 0.0
    %78 = vmatpush2.msra.mxu0 0.0
    %79 = vmatprep.subr.mxu0 0.0
    %80 = vmatpush2.msra.mxu0 0.0
    %81 = vmatprep.subr.mxu0 0.0
    %82 = vmatpush2.msra.mxu0 0.0
    %83 = vmatprep.subr.mxu0 0.0
    %84 = vmatpush2.msra.mxu0 0.0
    %85 = vmatprep.subr.mxu0 0.0
    %86 = vmatpush2.msra.mxu0 0.0
    %87 = vmatprep.subr.mxu0 0.0
    %88 = vmatpush2.msra.mxu0 0.0
    %89 = vmatprep.subr.mxu0 0.0
    %90 = vmatpush2.msra.mxu0 0.0
    %91 = vmatprep.subr.mxu0 0.0
    %92 = vmatpush2.msra.mxu0 0.0
    %93 = vmatprep.subr.mxu0 0.0
    %94 = vmatpush2.msra.mxu0 0.0
    %95 = vmatprep.subr.mxu0 0.0
    %96 = vmatpush2.msra.mxu0 0.0
    %97 = vmatprep.subr.mxu0 0.0
    %98 = vmatpush2.msra.mxu0 0.0
    %99 = vmatprep.subr.mxu0 0.0
    %100 = vmatpush2.msra.mxu0 0.0
    %101 = vmatprep.subr.mxu0 0.0
    %102 = vmatpush2.msra.mxu0 0.0
    %103 = vmatprep.subr.mxu0 0.0
    %104 = vmatpush2.msra.mxu0 0.0
    %105 = vmatprep.subr.mxu0 0.0
    %106 = vmatpush2.msra.mxu0 0.0
    %107 = vmatprep.subr.mxu0 0.0
    %108 = vmatpush2.msra.mxu0 0.0
    %109 = vmatprep.mubr.f32.mxu0 0.0
    %110 = vmatmul.mubr.f32.gmra.mxu0 %v21
    %v111 = vpop.f32.mrf.mxu0
    %v112 = vadd.f32 %v43, %v111
    %v113 = vpop.f32.mrf.mxu0
    %114 = vdwg.mxu0
    %vm115 = vcmp.gt.f32.partialorder %v112, 0.0
    %v116 = vmul.f32 %v112, 0.01
    %v117 = vsel %vm115, %v112, %v116
    %v118 = vld [vmem:[%s3] sm:$0xff]
    %v119 = vld [vmem:[%s3 + $0x8] sm:$0xff]
    %v120 = vld [vmem:[%s3 + $0x10] sm:$0xff]
    %v121 = vld [vmem:[%s3 + $0x18] sm:$0xff]
    %v122 = vld [vmem:[%s3 + $0x20] sm:$0xff]
    %v123 = vld [vmem:[%s3 + $0x28] sm:$0xff]
    %v124 = vld [vmem:[%s3 + $0x30] sm:$0xff]
    %v125 = vld [vmem:[%s3 + $0x38] sm:$0xff]
    %v126 = vld [vmem:[%s3 + $0x40] sm:$0xff]
    %v127 = vld [vmem:[%s3 + $0x48] sm:$0xff]
    %v128 = vld [vmem:[%s3 + $0x50] sm:$0xff]
    %v129 = vld [vmem:[%s3 + $0x58] sm:$0xff]
    %v130 = vld [vmem:[%s3 + $0x60] sm:$0xff]
    %v131 = vld [vmem:[%s3 + $0x68] sm:$0xff]
    %v132 = vld [vmem:[%s3 + $0x70] sm:$0xff]
    %v133 = vld [vmem:[%s3 + $0x78] sm:$0xff]
    %v134 = vld [vmem:[%s4] sm:$0x1]
    %v136 = vlaneseq
    %v137 = vshrl.u32 %v136, 7
    %v138 = vsub.s32 0, %v137
    %v139 = vrot.slane %v134, %v138
    %141 = vmatprep.subr.mxu0 0.0
    %142 = vmatpush1.msra.mxu0 %v133
    %143 = vmatprep.subr.mxu0 0.0
    %144 = vmatpush1.msra.mxu0 %v132
    %145 = vmatprep.subr.mxu0 0.0
    %146 = vmatpush1.msra.mxu0 %v131
    %147 = vmatprep.subr.mxu0 0.0
    %148 = vmatpush1.msra.mxu0 %v130
    %149 = vmatprep.subr.mxu0 0.0
    %150 = vmatpush1.msra.mxu0 %v129
    %151 = vmatprep.subr.mxu0 0.0
    %152 = vmatpush1.msra.mxu0 %v128
    %153 = vmatprep.subr.mxu0 0.0
    %154 = vmatpush1.msra.mxu0 %v127
    %155 = vmatprep.subr.mxu0 0.0
    %156 = vmatpush1.msra.mxu0 %v126
    %157 = vmatprep.subr.mxu0 0.0
    %158 = vmatpush1.msra.mxu0 %v125
    %159 = vmatprep.subr.mxu0 0.0
    %160 = vmatpush1.msra.mxu0 %v124
    %161 = vmatprep.subr.mxu0 0.0
    %162 = vmatpush1.msra.mxu0 %v123
    %163 = vmatprep.subr.mxu0 0.0
    %164 = vmatpush1.msra.mxu0 %v122
    %165 = vmatprep.subr.mxu0 0.0
    %166 = vmatpush1.msra.mxu0 %v121
    %167 = vmatprep.subr.mxu0 0.0
    %168 = vmatpush1.msra.mxu0 %v120
    %169 = vmatprep.subr.mxu0 0.0
    %170 = vmatpush1.msra.mxu0 %v119
    %171 = vmatprep.subr.mxu0 0.0
    %172 = vmatpush1.msra.mxu0 %v118
    %173 = vmatprep.subr.mxu0 0.0
    %174 = vmatpush2.msra.mxu0 0.0
    %175 = vmatprep.subr.mxu0 0.0
    %176 = vmatpush2.msra.mxu0 0.0
    %177 = vmatprep.subr.mxu0 0.0
    %178 = vmatpush2.msra.mxu0 0.0
    %179 = vmatprep.subr.mxu0 0.0
    %180 = vmatpush2.msra.mxu0 0.0
    %181 = vmatprep.subr.mxu0 0.0
    %182 = vmatpush2.msra.mxu0 0.0
    %183 = vmatprep.subr.mxu0 0.0
    %184 = vmatpush2.msra.mxu0 0.0
    %185 = vmatprep.subr.mxu0 0.0
    %186 = vmatpush2.msra.mxu0 0.0
    %187 = vmatprep.subr.mxu0 0.0
    %188 = vmatpush2.msra.mxu0 0.0
    %189 = vmatprep.subr.mxu0 0.0
    %190 = vmatpush2.msra.mxu0 0.0
    %191 = vmatprep.subr.mxu0 0.0
    %192 = vmatpush2.msra.mxu0 0.0
    %193 = vmatprep.subr.mxu0 0.0
    %194 = vmatpush2.msra.mxu0 0.0
    %195 = vmatprep.subr.mxu0 0.0
    %196 = vmatpush2.msra.mxu0 0.0
    %197 = vmatprep.subr.mxu0 0.0
    %198 = vmatpush2.msra.mxu0 0.0
    %199 = vmatprep.subr.mxu0 0.0
    %200 = vmatpush2.msra.mxu0 0.0
    %201 = vmatprep.subr.mxu0 0.0
    %202 = vmatpush2.msra.mxu0 0.0
    %203 = vmatprep.subr.mxu0 0.0
    %204 = vmatpush2.msra.mxu0 0.0
    %205 = vmatprep.mubr.f32.mxu0 0.0
    %206 = vmatmul.mubr.f32.gmra.mxu0 %v117
    %v207 = vpop.f32.mrf.mxu0
    %v208 = vadd.f32 %v139, %v207
    %v209 = vpop.f32.mrf.mxu0
    %210 = vdwg.mxu0
    %211 = vst [vmem:[#allocation2] sm:$0xff] %v208
    // Predicated region
    $region22: #{task_decoder_forward.1} parent=1 // pred_check
      _
    $region23: #{task_decoder_forward.1} parent=1 // pred_check_branch
      %213 = sbr.rel (0) target = $region25
    $region24: #{task_decoder_forward.1} parent=1 // pred_region
      %s215 = ssub.s32 128, 128
      %216 = vsyncadd [#allocation3], %s215
      %s218 = sshll.u32 [#allocation2], 4
      %s219 = int_to_ptr.vmem [resolvable:$true] %s218
      %221 = dma.vmem_to_hbm [thread:$0]  %s219, 128, %s5, [#allocation3]
    $region25: #{task_decoder_forward.1} parent=1 // pred_fallthru
      _
    // Predicated region
    $region26: #{task_decoder_forward.1} parent=1 // pred_check
      _
    $region27: #{task_decoder_forward.1} parent=1 // pred_check_branch
      %223 = sbr.rel (0) target = $region29
    $region28: #{task_decoder_forward.1} parent=1 // pred_region
      %224 = dma.done [#allocation3], 128
    $region29: #{task_decoder_forward.1} parent=1 // pred_fallthru
      _
    %225 = vsyncpa [#allocation3], 1

</llo_original>
